<compile_context>
chip_gen: v7x
topology: tpu7x:2x2x1
jax: 0.10.0
libtpu: 0.0.40
codegen_flags: <defaults>
</compile_context>

<pallas_src>
import jax
import jax.numpy as jnp
from jax.experimental import pallas as pl
from jax.experimental.pallas import tpu as pltpu


# Explicit scoped-VMEM budget: above v5e's 16 MiB default, at the v6e/v7x
# defaults, and far below every chip's physical VMEM (v7x: 64 MiB per TC).
_VMEM_LIMIT_BYTES = 32 * 1024 * 1024


def _round_up(x, m):
    return ((x + m - 1) // m) * m


def _pad2d(x, rows, cols):
    r, c = x.shape
    if (r, c) == (rows, cols):
        return x
    return jnp.pad(x, ((0, rows - r), (0, cols - c)))


def _spec(shape, index_map, buffers=None):
    """BlockSpec with optional explicit buffer count (fallback if unsupported)."""
    if buffers is None:
        return pl.BlockSpec(shape, index_map)
    try:
        return pl.BlockSpec(shape, index_map, pipeline_mode=pl.Buffered(buffers))
    except (TypeError, AttributeError):
        return pl.BlockSpec(shape, index_map)


# ----------------------------- Pallas kernels ------------------------------ #

def _align_conv_kernel(x_ref, w_ref, b_ref, o_ref):
    # x: (1, Cs, Thw) f32, w: (Ct, Cs) bf16, b: (Ct, 1) f32 -> o: (1, Ct, Thw).
    # Cast the activation tile to bf16 in-VMEM so the dot hits the bf16 MXU path.
    x_bf = x_ref[0].astype(jnp.bfloat16)
    acc = jnp.dot(w_ref[...], x_bf, preferred_element_type=jnp.float32) + b_ref[...]
    o_ref[0] = acc.astype(o_ref.dtype)


def _matmul_kernel(a_ref, b_ref, o_ref, acc_ref):
    # (tm, tk) @ (tk, tn) in bf16, f32 accumulation over the (last) K grid axis.
    @pl.when(pl.program_id(2) == 0)
    def _():
        acc_ref[...] = jnp.zeros_like(acc_ref)

    acc_ref[...] += jnp.dot(a_ref[...], b_ref[...],
                            preferred_element_type=jnp.float32)

    @pl.when(pl.program_id(2) == pl.num_programs(2) - 1)
    def _():
        o_ref[...] = acc_ref[...].astype(o_ref.dtype)


def _mse_sum_kernel(a_ref, b_ref, o_ref, acc_ref):
    # a, b: (Qp, t_hw) tiles. Accumulate lane-folded partial sums into a
    # (Qp, 128) VMEM scratch with plain VPU adds; one cross-lane reduce at end.
    j = pl.program_id(0)

    @pl.when(j == 0)
    def _():
        acc_ref[...] = jnp.zeros_like(acc_ref)

    d = a_ref[...].astype(jnp.float32) - b_ref[...].astype(jnp.float32)
    d2 = d * d
    part = acc_ref[...]
    lanes = d2.shape[1] // 128          # static, small (<= 16)
    for c in range(lanes):
        part = part + d2[:, c * 128:(c + 1) * 128]
    acc_ref[...] = part

    @pl.when(j == pl.num_programs(0) - 1)
    def _():
        o_ref[0, 0] = jnp.sum(acc_ref[...])


# ------------------------------ JAX wrappers -------------------------------- #

def pallas_matmul(a, b, *, tm, tn, tk, out_rows=None, out_cols=None,
                  out_dtype=jnp.float32):
    """Tiled MXU matmul a @ b.

    `a` (M, K) and `b` (K, N) must already be zero-padded so tm|M, tk|K, tn|N
    (the caller pads A once and reuses it). Returns out[:out_rows, :out_cols].
    """
    M, K = a.shape
    K2, N = b.shape
    assert K == K2 and M % tm == 0 and K % tk == 0 and N % tn == 0
    grid = (M // tm, N // tn, K // tk)
    in_bytes = a.dtype.itemsize
    out = pl.pallas_call(
        _matmul_kernel,
        out_shape=jax.ShapeDtypeStruct((M, N), out_dtype),
        grid_spec=pltpu.PrefetchScalarGridSpec(
            num_scalar_prefetch=0,
            grid=grid,
            in_specs=[pl.BlockSpec((tm, tk), lambda i, j, k: (i, k)),
                      pl.BlockSpec((tk, tn), lambda i, j, k: (k, j))],
            out_specs=pl.BlockSpec((tm, tn), lambda i, j, k: (i, j)),
            scratch_shapes=[pltpu.VMEM((tm, tn), jnp.float32)]),
        compiler_params=pltpu.CompilerParams(
            dimension_semantics=("parallel", "parallel", "arbitrary"),
            vmem_limit_bytes=_VMEM_LIMIT_BYTES),
        cost_estimate=pl.CostEstimate(
            flops=int(2 * M * N * K),
            transcendentals=0,
            bytes_accessed=int(in_bytes * (M * K + K * N)
                               + jnp.dtype(out_dtype).itemsize * M * N)),
    )(a, b)
    r = M if out_rows is None else out_rows
    c = N if out_cols is None else out_cols
    if (r, c) != (M, N):
        out = out[:r, :c]
    return out


def align_conv_1x1(x_nchw, weight, bias, *, out_dtype=jnp.bfloat16):
    """nn.Conv2d(Cs, Ct, kernel_size=1) on NCHW input.

    Contracts over Cs with H*W as the lane dim (no NCHW<->NHWC transposes) and
    returns the (N*Ct, H*W) matrix (stored bf16) the SVD consumes.
    """
    N, Cs, H, W = x_nchw.shape
    Ct = weight.shape[0]
    HW = H * W
    x = x_nchw.reshape(N, Cs, HW)                    # contiguous view, no transpose
    w2d = weight.reshape(Ct, Cs).astype(jnp.bfloat16)
    b2d = bias.reshape(Ct, 1).astype(jnp.float32)
    out_bytes = jnp.dtype(out_dtype).itemsize

    # Widest lane tile whose double-buffered in+out footprint stays ~< 12 MiB.
    t_hw = 128
    for cand in (2048, 1024, 512, 256, 128):
        if 2 * cand * (Cs * 4 + Ct * out_bytes) <= 12 * 1024 * 1024:
            t_hw = cand
            break
    t_hw = min(t_hw, _round_up(HW, 128))
    HWp = _round_up(HW, t_hw)
    if HWp != HW:
        x = jnp.pad(x, ((0, 0), (0, 0), (0, HWp - HW)))
    grid = (N, HWp // t_hw)

    out = pl.pallas_call(
        _align_conv_kernel,
        out_shape=jax.ShapeDtypeStruct((N, Ct, HWp), out_dtype),
        grid_spec=pltpu.PrefetchScalarGridSpec(
            num_scalar_prefetch=0,
            grid=grid,
            in_specs=[
                pl.BlockSpec((1, Cs, t_hw), lambda n, h: (n, 0, h)),
                _spec((Ct, Cs), lambda n, h: (0, 0), buffers=1),   # grid-invariant
                _spec((Ct, 1), lambda n, h: (0, 0), buffers=1),    # grid-invariant
            ],
            out_specs=pl.BlockSpec((1, Ct, t_hw), lambda n, h: (n, 0, h)),
        ),
        compiler_params=pltpu.CompilerParams(
            dimension_semantics=("parallel", "parallel"),
            vmem_limit_bytes=_VMEM_LIMIT_BYTES),
        cost_estimate=pl.CostEstimate(
            flops=int(2 * N * HWp * Cs * Ct),
            transcendentals=0,
            bytes_accessed=int(4 * N * Cs * HWp + 2 * Ct * Cs
                               + out_bytes * N * Ct * HWp)),
    )(x, w2d, b2d)
    if HWp != HW:
        out = out[:, :, :HW]
    return out.reshape(N * Ct, HW)


def mse_sum(a, b):
    """nn.MSELoss(reduction='sum') as a tiled Pallas reduction over the lane dim."""
    assert a.shape == b.shape
    Q, L = a.shape
    Qp = _round_up(Q, 8)
    # Widest lane tile keeping 2 inputs x 2 bufs of (Qp, t_hw) f32 under ~8 MiB
    # (safe on v5e's 16 MiB default scoped VMEM even before raising the limit).
    t_hw = 128
    for cand in (2048, 1024, 512, 256, 128):
        if 4 * Qp * cand * 4 <= 8 * 1024 * 1024:
            t_hw = cand
            break
    t_hw = min(t_hw, _round_up(L, 128))
    Lp = _round_up(L, t_hw)
    a = _pad2d(a.astype(jnp.float32), Qp, Lp)
    b = _pad2d(b.astype(jnp.float32), Qp, Lp)
    grid = (Lp // t_hw,)
    out = pl.pallas_call(
        _mse_sum_kernel,
        out_shape=jax.ShapeDtypeStruct((1, 1), jnp.float32),
        grid_spec=pltpu.PrefetchScalarGridSpec(
            num_scalar_prefetch=0,
            grid=grid,
            in_specs=[pl.BlockSpec((Qp, t_hw), lambda j: (0, j)),
                      pl.BlockSpec((Qp, t_hw), lambda j: (0, j))],
            out_specs=pl.BlockSpec((1, 1), lambda j: (0, 0),
                                   memory_space=pltpu.MemorySpace.SMEM),
            scratch_shapes=[pltpu.VMEM((Qp, 128), jnp.float32)]),
        compiler_params=pltpu.CompilerParams(
            dimension_semantics=("arbitrary",),
            vmem_limit_bytes=_VMEM_LIMIT_BYTES),
    )(a, b)
    return out[0, 0]


def _lowrank_right_singular_vectors(a2d, q, key, niter=2):
    """Randomized low-rank SVD (torch.svd_lowrank-style); returns Vh (q, n).

    A is cast to bf16 and zero-padded to tile multiples ONCE; every A-sized
    matmul (sketch, both power-iteration products, B = Q^T A) reuses it on the
    MXU with f32 accumulation. Only QR and the small (q, n) SVD stay in XLA.
    # TODO(synk): QR / small SVD have no clean Pallas equivalent and are the
    # likely wall-clock critical path (5 QRs at niter=2).
    # NOTE: like torch.svd_lowrank, singular vectors are only defined up to
    # sign / rotation within degenerate subspaces.
    """
    m, n = a2d.shape
    # Tiles: m/HW axes up to 512/1024, q axis clamped to round_up(q, 128) so a
    # skinny q is not padded further. Working set stays well under 16 MiB.
    TM = min(512, _round_up(m, 8))
    TN = min(1024, _round_up(n, 128))
    TQ = min(256, _round_up(q, 128))
    Mp, Np, Qp = _round_up(m, TM), _round_up(n, TN), _round_up(q, TQ)

    a_pad = _pad2d(a2d.astype(jnp.bfloat16), Mp, Np)     # pad A once, reuse

    def a_matmul(x):       # A @ x : x (n, q) -> (m, q) f32
        xp = _pad2d(x.astype(jnp.bfloat16), Np, Qp)
        return pallas_matmul(a_pad, xp, tm=TM, tn=TQ, tk=TN,
                             out_rows=m, out_cols=q)

    def at_matmul_t(x):    # x^T @ A : x (m, q) -> (q, n) f32  (== (A^T x)^T)
        xp = _pad2d(x.T.astype(jnp.bfloat16), Qp, Mp)
        return pallas_matmul(xp, a_pad, tm=TQ, tn=TN, tk=TM,
                             out_rows=q, out_cols=n)

    omega = jax.random.normal(key, (n, q), dtype=jnp.float32)
    y = a_matmul(omega)                                   # (m, q)
    q_mat, _ = jnp.linalg.qr(y)
    for _ in range(niter):
        zt = at_matmul_t(q_mat)                           # (q, n) = Q^T A
        z, _ = jnp.linalg.qr(zt.T)                        # (n, q)
        y = a_matmul(z)                                   # (m, q)
        q_mat, _ = jnp.linalg.qr(y)
    b_small = at_matmul_t(q_mat)                          # (q, n)
    _, _, vh = jnp.linalg.svd(b_small, full_matrices=False)
    return vh                                             # (q, n)


def svd_loss(preds_S, preds_T, align_w=None, align_b=None, *,
             loss_weight=1.0, num_decomposed=1000, niter=2, key=None):
    """Forward pass of SVDLoss.

    preds_S: (N, Cs, H, W) student features, preds_T: (N, Ct, H, W) teacher.
    """
    assert preds_S.shape[-2:] == preds_T.shape[-2:]
    N, C, H, W = preds_T.shape
    HW = H * W

    if align_w is not None:
        s2d = align_conv_1x1(preds_S, align_w, align_b)   # (N*Ct, HW), bf16
    else:
        s2d = preds_S.reshape(-1, HW)
    t2d = preds_T.reshape(-1, HW)
    assert s2d.shape == t2d.shape

    # torch.svd_lowrank cannot return more than min(rows, cols) useful vectors.
    q = min(num_decomposed, s2d.shape[0], HW)

    if key is None:
        key = jax.random.PRNGKey(42)
    k_s, k_t = jax.random.split(key)
    svh = _lowrank_right_singular_vectors(s2d, q, k_s, niter=niter)  # (q, HW)
    tvh = _lowrank_right_singular_vectors(t2d, q, k_t, niter=niter)  # (q, HW)

    # MSE(sum) over V equals MSE(sum) over Vh (same elements, transposed).
    loss = mse_sum(svh, tvh) / N
    return loss_weight * loss


# ---------------------------------- main ------------------------------------ #

if __name__ == "__main__":
    key = jax.random.PRNGKey(0)
    k_s, k_t, k_w, k_b = jax.random.split(key, 4)

    # Small shapes consistent with the module: N=2, Cs=4 (student), Ct=8
    # (teacher, so the align conv is exercised), H=W=16.
    N, Cs, Ct, H, W = 2, 4, 8, 16, 16
    num_decomposed = 8
    loss_weight = 1.0

    preds_S = jax.random.normal(k_s, (N, Cs, H, W), dtype=jnp.float32)
    preds_T = jax.random.normal(k_t, (N, Ct, H, W), dtype=jnp.float32)

    # Deterministic init of the 1x1 align conv parameters (Conv2d(Cs, Ct, 1)).
    align_w = jax.random.normal(k_w, (Ct, Cs, 1, 1), dtype=jnp.float32) * (1.0 / Cs) ** 0.5
    align_b = jax.random.normal(k_b, (Ct,), dtype=jnp.float32) * 0.01

    loss = svd_loss(preds_S, preds_T, align_w, align_b,
                    loss_weight=loss_weight, num_decomposed=num_decomposed)
    loss = jax.block_until_ready(loss)
    assert loss.shape == () and bool(jnp.isfinite(loss))
    print("KERNEL_OK")
</pallas_src>

<mosaic_0001>
module attributes {stable_mosaic.version = 11 : i64} {
  func.func @_align_conv_kernel(%arg0: i32, %arg1: i32, %arg2: memref<1x4x256xf32, #tpu.memory_space<vmem>>, %arg3: memref<8x4xbf16, #tpu.memory_space<vmem>>, %arg4: memref<8x1xf32, #tpu.memory_space<vmem>>, %arg5: memref<1x8x256xbf16, #tpu.memory_space<vmem>>) attributes {dimension_semantics = [#tpu.dimension_semantics<parallel>, #tpu.dimension_semantics<parallel>], iteration_bounds = array<i64: 2, 1>, scalar_prefetch = 0 : i64, scratch_operands = 0 : i64, tpu.core_type = #tpu.core_type<tc>, window_params = [{transform_indices = @transform_0, window_bounds = array<i64: 1, 4, 256>}, {pipeline_mode = #tpu.pipeline_mode<synchronous>, transform_indices = @transform_1, window_bounds = array<i64: 8, 4>}, {pipeline_mode = #tpu.pipeline_mode<synchronous>, transform_indices = @transform_2, window_bounds = array<i64: 8, 1>}, {transform_indices = @transform_3, window_bounds = array<i64: 1, 8, 256>}]} {
    %c0 = arith.constant 0 : index
    %c0_0 = arith.constant 0 : index
    %c0_1 = arith.constant 0 : index
    %0 = vector.load %arg2[%c0, %c0_0, %c0_1] : memref<1x4x256xf32, #tpu.memory_space<vmem>>, vector<1x4x256xf32>
    %1 = vector.shape_cast %0 : vector<1x4x256xf32> to vector<4x256xf32>
    %2 = arith.truncf %1 : vector<4x256xf32> to vector<4x256xbf16>
    %c0_2 = arith.constant 0 : index
    %c0_3 = arith.constant 0 : index
    %3 = vector.load %arg3[%c0_2, %c0_3] : memref<8x4xbf16, #tpu.memory_space<vmem>>, vector<8x4xbf16>
    %cst = arith.constant dense<0.000000e+00> : vector<8x256xf32>
    %4 = tpu.matmul %3, %2, %cst {dimension_numbers = #tpu.dot_dimension_numbers<[1], [0], [0], [1], [0, 0, 1, 1], [], []>} : vector<8x4xbf16>, vector<4x256xbf16>, vector<8x256xf32> -> vector<8x256xf32>
    %c0_4 = arith.constant 0 : index
    %c0_5 = arith.constant 0 : index
    %5 = vector.load %arg4[%c0_4, %c0_5] : memref<8x1xf32, #tpu.memory_space<vmem>>, vector<8x1xf32>
    %6 = vector.broadcast %5 : vector<8x1xf32> to vector<8x256xf32>
    %7 = arith.addf %4, %6 : vector<8x256xf32>
    %8 = arith.truncf %7 : vector<8x256xf32> to vector<8x256xbf16>
    %c0_6 = arith.constant 0 : index
    %c0_7 = arith.constant 0 : index
    %c0_8 = arith.constant 0 : index
    %9 = vector.load %arg5[%c0_6, %c0_7, %c0_8] : memref<1x8x256xbf16, #tpu.memory_space<vmem>>, vector<1x8x256xbf16>
    %10 = vector.shape_cast %9 : vector<1x8x256xbf16> to vector<8x256xbf16>
    %11 = vector.shape_cast %8 : vector<8x256xbf16> to vector<1x8x256xbf16>
    tpu.vector_store %arg5[%c0_6, %c0_7, %c0_8], %11 {strides = array<i32>} : memref<1x8x256xbf16, #tpu.memory_space<vmem>>, vector<1x8x256xbf16>,
    return
  }
  func.func @transform_0(%arg0: i32, %arg1: i32) -> (i32, i32, i32) {
    %c0_i32 = arith.constant 0 : i32
    %c0_i32_0 = arith.constant 0 : i32
    return %arg0, %c0_i32, %arg1 : i32, i32, i32
  }
  func.func @transform_1(%arg0: i32, %arg1: i32) -> (i32, i32) {
    %c0_i32 = arith.constant 0 : i32
    %c0_i32_0 = arith.constant 0 : i32
    %c0_i32_1 = arith.constant 0 : i32
    return %c0_i32, %c0_i32_0 : i32, i32
  }
  func.func @transform_2(%arg0: i32, %arg1: i32) -> (i32, i32) {
    %c0_i32 = arith.constant 0 : i32
    %c0_i32_0 = arith.constant 0 : i32
    %c0_i32_1 = arith.constant 0 : i32
    return %c0_i32, %c0_i32_0 : i32, i32
  }
  func.func @transform_3(%arg0: i32, %arg1: i32) -> (i32, i32, i32) {
    %c0_i32 = arith.constant 0 : i32
    %c0_i32_0 = arith.constant 0 : i32
    return %arg0, %c0_i32, %arg1 : i32, i32, i32
  }
}

</mosaic_0001>

<llo_original>
// kernel: tpu_custom_call.1
$region0: #{tpu_custom_call.1}
  #allocation0 [shape = 'u32[]', space=smem, size = 0x4, offset = 0x4, fixed_abs, tag = 'smem constant byte address 0x4 - core index']
  #allocation1 [shape = 'u32[144,128]{1,0:T(1,128)}', space=vmem, size = 0x12000, scoped, tag = 'internal scratch']
  %s0 = inlined_call_operand.hbm [shape: f32[2,4,256], index: 0, kind: input, shape index: {}]
  %s1 = inlined_call_operand.vmem [shape: bf16[8,4], index: 1, kind: input, shape index: {}]
  %s2 = inlined_call_operand.vmem [shape: f32[8,1], index: 2, kind: input, shape index: {}]
  %s3 = inlined_call_operand.hbm [shape: bf16[2,8,256], index: 3, kind: output, shape index: {}]
  %s4 = sld [smem:[#allocation0]]
  $region49: #{tpu_custom_call.1} parent=0
    _
  %s6 = ssub.s32 1, %s4
  %s7 = scalar_select 0, %s6, %s4
  $region1: #{tpu_custom_call.1} parent=0
    #allocation2 [shape = 'u8[8192]{0}', space=vmem, size = 0x2000, scoped, tag = 'input window, operand 0']
    #allocation3 [shape = 's32[2]{0}', space=sflag, size = 0x8, scoped, tag = 'scoped memory for tpu_custom_call.1']
    #allocation4 [shape = 's32[2]{0}', space=sflag, size = 0x8, scoped, tag = 'scoped memory for tpu_custom_call.1']
    #allocation5 [shape = 'u8[8192]{0}', space=vmem, size = 0x2000, scoped, tag = 'output window, operand 0']
    %8 = vsyncpa [#allocation3], 0
    %s9 = scalar_lea.sflag [#allocation3], 1
    %10 = vsyncpa %s9, 0
    %11 = vsyncpa [#allocation4], 0
    %s12 = scalar_lea.sflag [#allocation4], 1
    %13 = vsyncpa %s12, 0
    loop: start=0, step=1, limit=4
    $region2: #{tpu_custom_call.1} parent=1 // loop_pre_header
      _
    $region3: #{tpu_custom_call.1} parent=1 // loop_header
      %s15 = sphi 0, %s19
      %p16 = scmp.ge.s32.totalorder %s15, 4
      %s22 = sphi 0, %s34
      %s23 = sphi 0, %s30
      %s24 = sphi 0, %s22
      %s25 = sphi 0, %s23
      %s26 = sphi 0, %s24
      %s27 = sphi 0, %s25
      %s39 = sphi 0, %s41
      %s42 = sphi 0, %s39
      %s43 = sphi 0, %s42
      %s59 = sphi 0, %s43
      %s63 = sphi 0, %s63
      %s65 = sphi 0, %s63
      %s66 = sphi 0, %s65
      %s80 = sphi 0, %s66
      %s84 = sphi 0, %s84
      %s86 = sphi 0, %s84
      %s87 = sphi 0, %s86
      %s101 = sphi 0, %s87
      %s109 = sphi 0, %s111
      %s112 = sphi 0, %s109
      %s113 = sphi 0, %s112
      %s129 = sphi 0, %s113
    $region4: #{tpu_custom_call.1} parent=1 // loop_header_branch
      %18 = sbr.rel (%p16) target = $region8
    $region5: #{tpu_custom_call.1} parent=1 // loop_body
      %s20 = ssub.s32 %s15, 1
      %s21 = ssub.s32 %s15, 2
      %s28 = sadd.s32 1, %s23
      %p29 = scmp.ge.s32.totalorder %s28, 1
      %s30 = scalar_select %p29, 0, %s28
      %s31 = sadd.s32 1, %s22
      %s32 = scalar_select %p29, %s31, %s22
      %p33 = scmp.ge.s32.totalorder %s32, 2
      %s34 = scalar_select %p33, 0, %s32
      %s35 = ssub.s32 %s22, %s34
      %s36 = ssub.s32 %s23, %s30
      %s37 = sor.u32 %s35, %s36
      %p38 = scmp.eq.s32.totalorder %s37, 0
      %s40 = sadd.s32 %s39, 1
      %s41 = scalar_select %p38, %s39, %s40
      %p44 = pneg %p38
      %p45 = scmp.eq.s32.totalorder %s15, 1
      %p46 = por %p44, %p45
      %p47 = scmp.ne.s32.totalorder %s39, %s42
      %p48 = scmp.eq.s32.totalorder %s15, 0
      %p49 = por %p47, %p48
      %p50 = scmp.ne.s32.totalorder %s39, %s42
      %p51 = scmp.eq.s32.totalorder %s20, 1
      %p52 = por %p50, %p51
      %p53 = scmp.ne.s32.totalorder %s42, %s43
      %p54 = scmp.eq.s32.totalorder %s20, 0
      %p55 = por %p53, %p54
      %p56 = scmp.ne.s32.totalorder %s42, %s43
      %p57 = scmp.eq.s32.totalorder %s21, 1
      %p58 = por %p56, %p57
      %p60 = scmp.ne.s32.totalorder %s43, %s59
      %p61 = scmp.eq.s32.totalorder %s21, 0
      %p62 = por %p60, %p61
      %s64 = sadd.s32 %s63, 1
      %p67 = scmp.eq.s32.totalorder %s15, 1
      %p68 = scmp.ne.s32.totalorder %s63, %s65
      %p69 = scmp.eq.s32.totalorder %s15, 0
      %p70 = por %p68, %p69
      %p71 = scmp.ne.s32.totalorder %s63, %s65
      %p72 = scmp.eq.s32.totalorder %s20, 1
      %p73 = por %p71, %p72
      %p74 = scmp.ne.s32.totalorder %s65, %s66
      %p75 = scmp.eq.s32.totalorder %s20, 0
      %p76 = por %p74, %p75
      %p77 = scmp.ne.s32.totalorder %s65, %s66
      %p78 = scmp.eq.s32.totalorder %s21, 1
      %p79 = por %p77, %p78
      %p81 = scmp.ne.s32.totalorder %s66, %s80
      %p82 = scmp.eq.s32.totalorder %s21, 0
      %p83 = por %p81, %p82
      %s85 = sadd.s32 %s84, 1
      %p88 = scmp.eq.s32.totalorder %s15, 1
      %p89 = scmp.ne.s32.totalorder %s84, %s86
      %p90 = scmp.eq.s32.totalorder %s15, 0
      %p91 = por %p89, %p90
      %p92 = scmp.ne.s32.totalorder %s84, %s86
      %p93 = scmp.eq.s32.totalorder %s20, 1
      %p94 = por %p92, %p93
      %p95 = scmp.ne.s32.totalorder %s86, %s87
      %p96 = scmp.eq.s32.totalorder %s20, 0
      %p97 = por %p95, %p96
      %p98 = scmp.ne.s32.totalorder %s86, %s87
      %p99 = scmp.eq.s32.totalorder %s21, 1
      %p100 = por %p98, %p99
      %p102 = scmp.ne.s32.totalorder %s87, %s101
      %p103 = scmp.eq.s32.totalorder %s21, 0
      %p104 = por %p102, %p103
      %s105 = ssub.s32 %s22, %s34
      %s106 = ssub.s32 %s23, %s30
      %s107 = sor.u32 %s105, %s106
      %p108 = scmp.eq.s32.totalorder %s107, 0
      %s110 = sadd.s32 %s109, 1
      %s111 = scalar_select %p108, %s109, %s110
      %p114 = pneg %p108
      %p115 = scmp.eq.s32.totalorder %s15, 1
      %p116 = por %p114, %p115
      %p117 = scmp.ne.s32.totalorder %s109, %s112
      %p118 = scmp.eq.s32.totalorder %s15, 0
      %p119 = por %p117, %p118
      %p120 = scmp.ne.s32.totalorder %s109, %s112
      %p121 = scmp.eq.s32.totalorder %s20, 1
      %p122 = por %p120, %p121
      %p123 = scmp.ne.s32.totalorder %s112, %s113
      %p124 = scmp.eq.s32.totalorder %s20, 0
      %p125 = por %p123, %p124
      %p126 = scmp.ne.s32.totalorder %s112, %s113
      %p127 = scmp.eq.s32.totalorder %s21, 1
      %p128 = por %p126, %p127
      %p130 = scmp.ne.s32.totalorder %s113, %s129
      %p131 = scmp.eq.s32.totalorder %s21, 0
      %p132 = por %p130, %p131
      %p133 = scmp.le.s32.totalorder 1, %s15
      %p134 = scmp.lt.s32.totalorder %s15, 3
      %p135 = pnand %p133, %p134
      %p136 = pneg %p135
      // Predicated region
      $region9: #{tpu_custom_call.1} parent=5 // pred_check
        _
      $region10: #{tpu_custom_call.1} parent=5 // pred_check_branch
        %138 = sbr.rel (%p135) target = $region12
      $region11: #{tpu_custom_call.1} parent=5 // pred_region
        %s139 = ssub.s32 %s15, 1
        // Predicated region
        $region13: #{tpu_custom_call.1} parent=11 // pred_check
          %p140 = pneg %p76
        $region14: #{tpu_custom_call.1} parent=11 // pred_check_branch
          %142 = sbr.rel (%p140) target = $region16
        $region15: #{tpu_custom_call.1} parent=11 // pred_region
          _
        $region16: #{tpu_custom_call.1} parent=11 // pred_fallthru
          _
        // Predicated region
        $region17: #{tpu_custom_call.1} parent=11 // pred_check
          %p143 = pneg %p97
        $region18: #{tpu_custom_call.1} parent=11 // pred_check_branch
          %145 = sbr.rel (%p143) target = $region20
        $region19: #{tpu_custom_call.1} parent=11 // pred_region
          _
        $region20: #{tpu_custom_call.1} parent=11 // pred_fallthru
          _
      $region12: #{tpu_custom_call.1} parent=5 // pred_fallthru
        _
      %p146 = scmp.lt.s32.totalorder %s15, 2
      // Predicated region
      $region21: #{tpu_custom_call.1} parent=5 // pred_check
        %p147 = pneg %p146
      $region22: #{tpu_custom_call.1} parent=5 // pred_check_branch
        %149 = sbr.rel (%p147) target = $region24
      $region23: #{tpu_custom_call.1} parent=5 // pred_region
        // Predicated region
        $region25: #{tpu_custom_call.1} parent=23 // pred_check
          %p150 = pneg %p49
        $region26: #{tpu_custom_call.1} parent=23 // pred_check_branch
          %152 = sbr.rel (%p150) target = $region28
        $region27: #{tpu_custom_call.1} parent=23 // pred_region
          %s153 = sand.u32 %s39, 1
          %s154 = scalar_lea.sflag [#allocation3], %s153
          %s155 = sand.u32 %s39, 1
          %s156 = smul.addr %s155, 8
          %s157 = scalar_lea.vmem [#allocation2], %s156
          %s158 = smul.u32 2, %s23
          %s160 = ssub.s32 128, 128
          %161 = vsyncadd %s154, %s160
          %s162 = smul.addr %s22, 2
          %s163 = sadd.s32 %s158, %s162
          %s164 = smul.addr %s163, 64
          %s165 = scalar_lea.hbm %s0, %s164
          %s167 = sshll.u32 %s157, 4
          %s168 = int_to_ptr.vmem [resolvable:$true] %s167
          %170 = dma.hbm_to_vmem [thread:$0]  %s165, 128, %s168, %s154
        $region28: #{tpu_custom_call.1} parent=23 // pred_fallthru
          _
      $region24: #{tpu_custom_call.1} parent=5 // pred_fallthru
        _
      %p171 = scmp.le.s32.totalorder 1, %s15
      %p172 = scmp.lt.s32.totalorder %s15, 3
      %p173 = pnand %p171, %p172
      %p174 = pneg %p173
      // Predicated region
      $region29: #{tpu_custom_call.1} parent=5 // pred_check
        _
      $region30: #{tpu_custom_call.1} parent=5 // pred_check_branch
        %176 = sbr.rel (%p173) target = $region32
      $region31: #{tpu_custom_call.1} parent=5 // pred_region
        %s177 = ssub.s32 %s15, 1
        %s178 = sand.u32 %s42, 1
        %s179 = scalar_lea.sflag [#allocation3], %s178
        %s180 = sand.u32 %s42, 1
        %s181 = smul.addr %s180, 8
        %s182 = scalar_lea.vmem [#allocation2], %s181
        // Predicated region
        $region33: #{tpu_custom_call.1} parent=31 // pred_check
          %p183 = pneg %p55
        $region34: #{tpu_custom_call.1} parent=31 // pred_check_branch
          %185 = sbr.rel (%p183) target = $region36
        $region35: #{tpu_custom_call.1} parent=31 // pred_region
          %186 = dma.done %s179, 128
        $region36: #{tpu_custom_call.1} parent=31 // pred_fallthru
          _
        %s187 = sand.u32 %s42, 1
        %s188 = scalar_lea.sflag [#allocation3], %s187
        %s189 = sand.u32 %s42, 1
        %s190 = smul.addr %s189, 8
        %s191 = scalar_lea.vmem [#allocation2], %s190
        %p192 = pneg %p55
        %p193 = pneg %p52
        %p194 = pneg %p76
        %p195 = pneg %p73
        %p196 = pneg %p97
        %p197 = pneg %p94
        %p198 = pneg %p125
        %p199 = pneg %p122
        %s200 = sand.u32 %s112, 1
        %s201 = scalar_lea.sflag [#allocation4], %s200
        %s202 = sand.u32 %s112, 1
        %s203 = smul.addr %s202, 8
        %s204 = scalar_lea.vmem [#allocation5], %s203
        %s205 = smul.u32 2, %s25
        %s206 = smul.u32 2, %s25
        %v208 = vld [vmem:[%s182] sm:$0xff]
        %v210 = vcombine.high %v208, %v208
        %v212 = vpack.c.bf16 %v208, %v208
        %v213 = vpack.c.bf16 %v210, %v210
        %v214 = vld [vmem:[%s1] sm:$0xf]
        %v215 = vld [vmem:[%s2] sm:$0xff]
        %217 = vset.pattern.permute.xlu0 0
        %218 = vperm.xlu0 %217, %v215
        %v219 = vpop.permute.xlu0 %218
        %vm221 = vcmask 31744
        %v223 = vsel %vm221, %v214, 0
        %vm225 = vcmask 1041408
        %v227 = vsel %vm225, %v212, 0
        %v230 = vsel %vm225, %v213, 0
        %232 = vmatprep.subr.bf16.mxu0 %v230
        %233 = vmatpush1.bf16.msra.mxu0 %v227
        %234 = vmatprep.subr.bf16.mxu0 0
        %235 = vmatpush1.bf16.msra.mxu0 0
        %236 = vmatprep.subr.bf16.mxu0 0
        %237 = vmatpush1.bf16.msra.mxu0 0
        %238 = vmatprep.subr.bf16.mxu0 0
        %239 = vmatpush1.bf16.msra.mxu0 0
        %240 = vmatprep.subr.bf16.mxu0 0
        %241 = vmatpush1.bf16.msra.mxu0 0
        %242 = vmatprep.subr.bf16.mxu0 0
        %243 = vmatpush1.bf16.msra.mxu0 0
        %244 = vmatprep.subr.bf16.mxu0 0
        %245 = vmatpush1.bf16.msra.mxu0 0
        %246 = vmatprep.subr.bf16.mxu0 0
        %247 = vmatpush1.bf16.msra.mxu0 0
        %248 = vmatprep.subr.bf16.mxu0 0
        %249 = vmatpush1.bf16.msra.mxu0 0
        %250 = vmatprep.subr.bf16.mxu0 0
        %251 = vmatpush1.bf16.msra.mxu0 0
        %252 = vmatprep.subr.bf16.mxu0 0
        %253 = vmatpush1.bf16.msra.mxu0 0
        %254 = vmatprep.subr.bf16.mxu0 0
        %255 = vmatpush1.bf16.msra.mxu0 0
        %256 = vmatprep.subr.bf16.mxu0 0
        %257 = vmatpush1.bf16.msra.mxu0 0
        %258 = vmatprep.subr.bf16.mxu0 0
        %259 = vmatpush1.bf16.msra.mxu0 0
        %260 = vmatprep.subr.bf16.mxu0 0
        %261 = vmatpush1.bf16.msra.mxu0 0
        %262 = vmatprep.subr.bf16.mxu0 0
        %263 = vmatpush1.bf16.msra.mxu0 0
        %264 = vmatprep.mubr.bf16.mxu0 0
        %265 = vmatmul.mubr.bf16.gmra.mrb[0].mxu0 %v223
        %v266 = vpop.f32.mrb[0].mxu0
        %v267 = vadd.f32 %v219, %v266
        %v268 = vpop.f32.mrb[0].mxu0
        %v269 = vadd.f32 %v219, %v268
        %v270 = vpop.f32.mrb[0].mxu0
        %v271 = vpop.f32.mrb[0].mxu0
        %272 = vdwg.mxu0
        %v273 = vpack.c.bf16 %v267, %v267
        %v274 = vpack.c.bf16 %v269, %v269
        %v277 = vunpack.c.l.b16 %v273
        %v278 = vunpack.c.l.b16 %v274
        %v279 = vpack.c.b16 %v278, %v277
        %281 = vst [vmem:[%s204] sm:$0xff] %v279
        %s282 = sand.u32 %s112, 1
        %s283 = scalar_lea.sflag [#allocation4], %s282
        %s284 = sand.u32 %s112, 1
        %s285 = smul.addr %s284, 8
        %s286 = scalar_lea.vmem [#allocation5], %s285
        // Predicated region
        $region37: #{tpu_custom_call.1} parent=31 // pred_check
          %p287 = pneg %p122
        $region38: #{tpu_custom_call.1} parent=31 // pred_check_branch
          %289 = sbr.rel (%p287) target = $region40
        $region39: #{tpu_custom_call.1} parent=31 // pred_region
          %s290 = smul.u32 2, %s25
          %s292 = ssub.s32 128, 128
          %293 = vsyncadd %s283, %s292
          %s294 = smul.addr %s24, 2
          %s295 = sadd.s32 %s290, %s294
          %s296 = smul.addr %s295, 64
          %s297 = scalar_lea.hbm %s3, %s296
          %s299 = sshll.u32 %s286, 4
          %s300 = int_to_ptr.vmem [resolvable:$true] %s299
          %302 = dma.vmem_to_hbm [thread:$0]  %s300, 128, %s297, %s283
        $region40: #{tpu_custom_call.1} parent=31 // pred_fallthru
          _
      $region32: #{tpu_custom_call.1} parent=5 // pred_fallthru
        _
      %p303 = scmp.le.s32.totalorder 2, %s15
      // Predicated region
      $region41: #{tpu_custom_call.1} parent=5 // pred_check
        %p304 = pneg %p303
      $region42: #{tpu_custom_call.1} parent=5 // pred_check_branch
        %306 = sbr.rel (%p304) target = $region44
      $region43: #{tpu_custom_call.1} parent=5 // pred_region
        %s307 = ssub.s32 %s15, 2
        // Predicated region
        $region45: #{tpu_custom_call.1} parent=43 // pred_check
          %p308 = pneg %p128
        $region46: #{tpu_custom_call.1} parent=43 // pred_check_branch
          %310 = sbr.rel (%p308) target = $region48
        $region47: #{tpu_custom_call.1} parent=43 // pred_region
          %s311 = sand.u32 %s113, 1
          %s312 = scalar_lea.sflag [#allocation4], %s311
          %s313 = sand.u32 %s113, 1
          %s314 = smul.addr %s313, 8
          %s315 = scalar_lea.vmem [#allocation5], %s314
          %316 = dma.done %s312, 128
        $region48: #{tpu_custom_call.1} parent=43 // pred_fallthru
          _
      $region44: #{tpu_custom_call.1} parent=5 // pred_fallthru
        _
    $region6: #{tpu_custom_call.1} parent=1 // loop_footer
      %s19 = sadd.s32 1, %s15
    $region7: #{tpu_custom_call.1} parent=1 // loop_footer_branch
      %14 = sbr.rel target = $region3
    $region8: #{tpu_custom_call.1} parent=1 // loop_exit
      _
    %317 = vsyncpa [#allocation3], 1
    %s318 = scalar_lea.sflag [#allocation3], 1
    %319 = vsyncpa %s318, 1
    %320 = vsyncpa [#allocation4], 1
    %s321 = scalar_lea.sflag [#allocation4], 1
    %322 = vsyncpa %s321, 1

</llo_original>
